<compile_context>
chip_gen: v5e
topology: v5e:2x2
jax: 0.10.0
libtpu: 0.0.40
codegen_flags: <defaults>
</compile_context>

<pallas_src>
import functools

import jax
import jax.numpy as jnp
from jax.experimental import pallas as pl
from jax.experimental.pallas import tpu as pltpu

IN_FEATURES = 1
OUT_FEATURES = 5


def linear_kernel(x_ref, w_ref, b_ref, o_ref):
    # x_ref: (1, TB) f32 in VMEM   (batch on the lane axis)
    # w_ref: (OUT,)  f32 in SMEM   (weight[:, 0])
    # b_ref: (OUT,)  f32 in SMEM
    # o_ref: (OUT, TB) f32 in VMEM (transposed output, batch on lanes)
    x = x_ref[...]  # (1, TB)
    for o in range(OUT_FEATURES):  # static unroll, OUT_FEATURES == 5
        # scalar (SMEM) * vector + scalar  -> pure VPU broadcast multiply-add
        o_ref[pl.ds(o, 1), :] = x * w_ref[o] + b_ref[o]


@functools.partial(jax.jit, static_argnames=("batch_block",))
def linear_pallas(x, weight, bias, *, batch_block=1024):
    """y = x @ weight.T + bias, matching torch.nn.Linear(1, 5).

    x:      (B, 1)  float32
    weight: (5, 1)  float32 (PyTorch layout)
    bias:   (5,)    float32
    returns (B, 5)  float32
    """
    B, in_f = x.shape
    out_f, in_f2 = weight.shape
    assert in_f == in_f2 == IN_FEATURES and out_f == OUT_FEATURES

    # IN == 1, so (B, 1) -> (1, B) is a pure relabel (no data movement).
    x_row = x.reshape(1, B)
    w_flat = weight.reshape(out_f)   # (5,)
    b_flat = bias.reshape(out_f)     # (5,)

    smem_spec = pl.BlockSpec(memory_space=pltpu.MemorySpace.SMEM)
    vmem_spec = pl.BlockSpec(memory_space=pltpu.MemorySpace.VMEM)

    if B <= batch_block:
        # Small batch: single full-array block, no grid, no pipeline overhead.
        y_t = pl.pallas_call(
            linear_kernel,
            out_shape=jax.ShapeDtypeStruct((out_f, B), x.dtype),
            in_specs=[vmem_spec, smem_spec, smem_spec],
            out_specs=vmem_spec,
        )(x_row, w_flat, b_flat)
    else:
        # Large batch: tile the lane (batch) axis, mark it parallel so it can
        # shard across TensorCores (v7x megacore).
        grid = (pl.cdiv(B, batch_block),)
        y_t = pl.pallas_call(
            linear_kernel,
            out_shape=jax.ShapeDtypeStruct((out_f, B), x.dtype),
            grid=grid,
            in_specs=[
                pl.BlockSpec((1, batch_block), lambda i: (0, i)),
                smem_spec,
                smem_spec,
            ],
            out_specs=pl.BlockSpec((out_f, batch_block), lambda i: (0, i)),
            compiler_params=pltpu.CompilerParams(
                dimension_semantics=("parallel",)),
        )(x_row, w_flat, b_flat)

    return y_t.T  # (B, OUT)


if __name__ == "__main__":
    key = jax.random.PRNGKey(0)
    kx, kx2, kw, kb = jax.random.split(key, 4)

    # Deterministic parameters, same shapes as nn.Linear(1, 5).
    weight = jax.random.normal(kw, (OUT_FEATURES, IN_FEATURES), jnp.float32) * 0.5
    bias = jax.random.normal(kb, (OUT_FEATURES,), jnp.float32) * 0.1

    # Small batch (gridless path).
    x_small = jax.random.normal(kx, (8, IN_FEATURES), jnp.float32)
    y_small = linear_pallas(x_small, weight, bias)
    jax.block_until_ready(y_small)
    ref_small = x_small @ weight.T + bias
    assert y_small.shape == (8, OUT_FEATURES)
    assert jnp.allclose(y_small, ref_small, atol=1e-5, rtol=1e-5)

    # Large batch (tiled, "parallel" batch-lane grid path).
    x_large = jax.random.normal(kx2, (4096, IN_FEATURES), jnp.float32)
    y_large = linear_pallas(x_large, weight, bias)
    jax.block_until_ready(y_large)
    ref_large = x_large @ weight.T + bias
    assert y_large.shape == (4096, OUT_FEATURES)
    assert jnp.allclose(y_large, ref_large, atol=1e-5, rtol=1e-5)

    print("KERNEL_OK")
</pallas_src>

<mosaic_0001>
module attributes {stable_mosaic.version = 11 : i64} {
  func.func @linear_kernel(%arg0: memref<1x8xf32, #tpu.memory_space<vmem>>, %arg1: memref<5xf32, #tpu.memory_space<smem>>, %arg2: memref<5xf32, #tpu.memory_space<smem>>, %arg3: memref<5x8xf32, #tpu.memory_space<vmem>>) attributes {dimension_semantics = [], scalar_prefetch = 0 : i64, scratch_operands = 0 : i64, tpu.core_type = #tpu.core_type<tc>} {
    %c0 = arith.constant 0 : index
    %c0_0 = arith.constant 0 : index
    %0 = vector.load %arg0[%c0, %c0_0] : memref<1x8xf32, #tpu.memory_space<vmem>>, vector<1x8xf32>
    %c0_1 = arith.constant 0 : index
    %1 = memref.load %arg1[%c0_1] : memref<5xf32, #tpu.memory_space<smem>>
    %2 = vector.broadcast %1 : f32 to vector<1x8xf32>
    %3 = arith.mulf %0, %2 : vector<1x8xf32>
    %c0_2 = arith.constant 0 : index
    %4 = memref.load %arg2[%c0_2] : memref<5xf32, #tpu.memory_space<smem>>
    %5 = vector.broadcast %4 : f32 to vector<1x8xf32>
    %6 = arith.addf %3, %5 : vector<1x8xf32>
    %c0_3 = arith.constant 0 : index
    %c0_4 = arith.constant 0 : index
    %7 = vector.load %arg3[%c0_3, %c0_4] : memref<5x8xf32, #tpu.memory_space<vmem>>, vector<1x8xf32>
    tpu.vector_store %arg3[%c0_3, %c0_4], %6 {strides = array<i32>} : memref<5x8xf32, #tpu.memory_space<vmem>>, vector<1x8xf32>,
    %c1 = arith.constant 1 : index
    %8 = memref.load %arg1[%c1] : memref<5xf32, #tpu.memory_space<smem>>
    %9 = vector.broadcast %8 : f32 to vector<1x8xf32>
    %10 = arith.mulf %0, %9 : vector<1x8xf32>
    %c1_5 = arith.constant 1 : index
    %11 = memref.load %arg2[%c1_5] : memref<5xf32, #tpu.memory_space<smem>>
    %12 = vector.broadcast %11 : f32 to vector<1x8xf32>
    %13 = arith.addf %10, %12 : vector<1x8xf32>
    %c1_6 = arith.constant 1 : index
    %c0_7 = arith.constant 0 : index
    %14 = vector.load %arg3[%c1_6, %c0_7] : memref<5x8xf32, #tpu.memory_space<vmem>>, vector<1x8xf32>
    tpu.vector_store %arg3[%c1_6, %c0_7], %13 {strides = array<i32>} : memref<5x8xf32, #tpu.memory_space<vmem>>, vector<1x8xf32>,
    %c2 = arith.constant 2 : index
    %15 = memref.load %arg1[%c2] : memref<5xf32, #tpu.memory_space<smem>>
    %16 = vector.broadcast %15 : f32 to vector<1x8xf32>
    %17 = arith.mulf %0, %16 : vector<1x8xf32>
    %c2_8 = arith.constant 2 : index
    %18 = memref.load %arg2[%c2_8] : memref<5xf32, #tpu.memory_space<smem>>
    %19 = vector.broadcast %18 : f32 to vector<1x8xf32>
    %20 = arith.addf %17, %19 : vector<1x8xf32>
    %c2_9 = arith.constant 2 : index
    %c0_10 = arith.constant 0 : index
    %21 = vector.load %arg3[%c2_9, %c0_10] : memref<5x8xf32, #tpu.memory_space<vmem>>, vector<1x8xf32>
    tpu.vector_store %arg3[%c2_9, %c0_10], %20 {strides = array<i32>} : memref<5x8xf32, #tpu.memory_space<vmem>>, vector<1x8xf32>,
    %c3 = arith.constant 3 : index
    %22 = memref.load %arg1[%c3] : memref<5xf32, #tpu.memory_space<smem>>
    %23 = vector.broadcast %22 : f32 to vector<1x8xf32>
    %24 = arith.mulf %0, %23 : vector<1x8xf32>
    %c3_11 = arith.constant 3 : index
    %25 = memref.load %arg2[%c3_11] : memref<5xf32, #tpu.memory_space<smem>>
    %26 = vector.broadcast %25 : f32 to vector<1x8xf32>
    %27 = arith.addf %24, %26 : vector<1x8xf32>
    %c3_12 = arith.constant 3 : index
    %c0_13 = arith.constant 0 : index
    %28 = vector.load %arg3[%c3_12, %c0_13] : memref<5x8xf32, #tpu.memory_space<vmem>>, vector<1x8xf32>
    tpu.vector_store %arg3[%c3_12, %c0_13], %27 {strides = array<i32>} : memref<5x8xf32, #tpu.memory_space<vmem>>, vector<1x8xf32>,
    %c4 = arith.constant 4 : index
    %29 = memref.load %arg1[%c4] : memref<5xf32, #tpu.memory_space<smem>>
    %30 = vector.broadcast %29 : f32 to vector<1x8xf32>
    %31 = arith.mulf %0, %30 : vector<1x8xf32>
    %c4_14 = arith.constant 4 : index
    %32 = memref.load %arg2[%c4_14] : memref<5xf32, #tpu.memory_space<smem>>
    %33 = vector.broadcast %32 : f32 to vector<1x8xf32>
    %34 = arith.addf %31, %33 : vector<1x8xf32>
    %c4_15 = arith.constant 4 : index
    %c0_16 = arith.constant 0 : index
    %35 = vector.load %arg3[%c4_15, %c0_16] : memref<5x8xf32, #tpu.memory_space<vmem>>, vector<1x8xf32>
    tpu.vector_store %arg3[%c4_15, %c0_16], %34 {strides = array<i32>} : memref<5x8xf32, #tpu.memory_space<vmem>>, vector<1x8xf32>,
    return
  }
}

</mosaic_0001>

<llo_original>
// kernel: linear_pallas.1
$region0: #{linear_pallas.1}
  #allocation0 [shape = 'u32[]', space=smem, size = 0x4, offset = 0x4, fixed_abs, tag = 'smem constant byte address 0x4 - core index']
  #allocation1 [shape = 'u32[72,128]{1,0:T(1,128)}', space=vmem, size = 0x9000, scoped, tag = 'internal scratch']
  %s0 = inlined_call_operand.vmem [shape: f32[1,8], index: 0, kind: input, shape index: {}]
  %s1 = inlined_call_operand.vmem [shape: f32[5], index: 1, kind: input, shape index: {}]
  %s2 = inlined_call_operand.vmem [shape: f32[5], index: 2, kind: input, shape index: {}]
  %s3 = inlined_call_operand.vmem [shape: f32[5,8], index: 3, kind: output, shape index: {}]
  %s4 = sld [smem:[#allocation0]]
  $region30: #{linear_pallas.1} parent=0
    _
  %s6 = ssub.s32 1, %s4
  %s7 = scalar_select 0, %s6, %s4
  $region1: #{linear_pallas.1} parent=0
    #allocation2 [shape = 'u8[512]{0}', space=smem, size = 0x200, scoped, tag = 'input window, operand 1, single buffered']
    #allocation3 [shape = 's32[1]{0}', space=sflag, size = 0x4, scoped, tag = 'scoped memory for linear_pallas.1']
    #allocation4 [shape = 'u8[512]{0}', space=smem, size = 0x200, scoped, tag = 'input window, operand 2, single buffered']
    #allocation5 [shape = 's32[1]{0}', space=sflag, size = 0x4, scoped, tag = 'scoped memory for linear_pallas.1']
    %8 = vsyncpa [#allocation3], 0
    %9 = vsyncpa [#allocation5], 0
    // Predicated region
    $region2: #{linear_pallas.1} parent=1 // pred_check
      _
    $region3: #{linear_pallas.1} parent=1 // pred_check_branch
      %11 = sbr.rel (0) target = $region5
    $region4: #{linear_pallas.1} parent=1 // pred_region
      _
    $region5: #{linear_pallas.1} parent=1 // pred_fallthru
      _
    // Predicated region
    $region6: #{linear_pallas.1} parent=1 // pred_check
      _
    $region7: #{linear_pallas.1} parent=1 // pred_check_branch
      %13 = sbr.rel (0) target = $region9
    $region8: #{linear_pallas.1} parent=1 // pred_region
      %15 = vsyncadd [#allocation3], 0
      %s17 = sshll.u32 %s1, 4
      %s18 = int_to_ptr.vmem [resolvable:$true] %s17
      %20 = dma.vmem_to_smem %s18, 16, [#allocation2], [#allocation3]
    $region9: #{linear_pallas.1} parent=1 // pred_fallthru
      _
    // Predicated region
    $region10: #{linear_pallas.1} parent=1 // pred_check
      _
    $region11: #{linear_pallas.1} parent=1 // pred_check_branch
      %22 = sbr.rel (0) target = $region13
    $region12: #{linear_pallas.1} parent=1 // pred_region
      %24 = vsyncadd [#allocation5], 0
      %s26 = sshll.u32 %s2, 4
      %s27 = int_to_ptr.vmem [resolvable:$true] %s26
      %29 = dma.vmem_to_smem %s27, 16, [#allocation4], [#allocation5]
    $region13: #{linear_pallas.1} parent=1 // pred_fallthru
      _
    // Predicated region
    $region14: #{linear_pallas.1} parent=1 // pred_check
      _
    $region15: #{linear_pallas.1} parent=1 // pred_check_branch
      %31 = sbr.rel (0) target = $region17
    $region16: #{linear_pallas.1} parent=1 // pred_region
      %33 = dma.done [#allocation3], 16
    $region17: #{linear_pallas.1} parent=1 // pred_fallthru
      _
    // Predicated region
    $region18: #{linear_pallas.1} parent=1 // pred_check
      _
    $region19: #{linear_pallas.1} parent=1 // pred_check_branch
      %35 = sbr.rel (0) target = $region21
    $region20: #{linear_pallas.1} parent=1 // pred_region
      %37 = dma.done [#allocation5], 16
    $region21: #{linear_pallas.1} parent=1 // pred_fallthru
      _
    %38 = sfence
    %v39 = vld [vmem:[%s0] sm:$0x1]
    %s40 = sld [smem:[#allocation2]]
    %v41 = vstv %s40
    %v42 = vmul.f32 %v39, %v41
    %s43 = sld [smem:[#allocation4]]
    %v44 = vstv %s43
    %v45 = vadd.f32 %v42, %v44
    %vm46 = vcmask 57344
    %47 = vst.msk [vmem:[%s3] sm:$0x1] %vm46, %v45
    %s48 = sld [smem:[#allocation2 + $0x1]]
    %v49 = vstv %s48
    %v50 = vmul.f32 %v39, %v49
    %s51 = sld [smem:[#allocation4 + $0x1]]
    %v52 = vstv %s51
    %v53 = vadd.f32 %v50, %v52
    %54 = vst.msk [vmem:[%s3 + $0x1] sm:$0x1] %vm46, %v53
    %s55 = sld [smem:[#allocation2 + $0x2]]
    %v56 = vstv %s55
    %v57 = vmul.f32 %v39, %v56
    %s58 = sld [smem:[#allocation4 + $0x2]]
    %v59 = vstv %s58
    %v60 = vadd.f32 %v57, %v59
    %61 = vst.msk [vmem:[%s3 + $0x2] sm:$0x1] %vm46, %v60
    %s62 = sld [smem:[#allocation2 + $0x3]]
    %v63 = vstv %s62
    %v64 = vmul.f32 %v39, %v63
    %s65 = sld [smem:[#allocation4 + $0x3]]
    %v66 = vstv %s65
    %v67 = vadd.f32 %v64, %v66
    %68 = vst.msk [vmem:[%s3 + $0x3] sm:$0x1] %vm46, %v67
    %s69 = sld [smem:[#allocation2 + $0x4]]
    %v70 = vstv %s69
    %v71 = vmul.f32 %v39, %v70
    %s72 = sld [smem:[#allocation4 + $0x4]]
    %v73 = vstv %s72
    %v74 = vadd.f32 %v71, %v73
    %75 = vst.msk [vmem:[%s3 + $0x4] sm:$0x1] %vm46, %v74
    // Predicated region
    $region22: #{linear_pallas.1} parent=1 // pred_check
      _
    $region23: #{linear_pallas.1} parent=1 // pred_check_branch
      %77 = sbr.rel (0) target = $region25
    $region24: #{linear_pallas.1} parent=1 // pred_region
      _
    $region25: #{linear_pallas.1} parent=1 // pred_fallthru
      _
    // Predicated region
    $region26: #{linear_pallas.1} parent=1 // pred_check
      _
    $region27: #{linear_pallas.1} parent=1 // pred_check_branch
      %79 = sbr.rel (0) target = $region29
    $region28: #{linear_pallas.1} parent=1 // pred_region
      _
    $region29: #{linear_pallas.1} parent=1 // pred_fallthru
      _
    %80 = vsyncpa [#allocation3], 1
    %81 = vsyncpa [#allocation5], 1

</llo_original>
